<compile_context>
chip_gen: v7x
topology: tpu7x:2x2x1
jax: 0.10.0
libtpu: 0.0.40
codegen_flags: <defaults>
</compile_context>

<pallas_src>
import jax
import jax.numpy as jnp
from jax.experimental import pallas as pl
from jax.experimental.pallas import tpu as pltpu

K_IN = 6        # true input features (after Flatten)
K_PAD = 8       # w1 rows padded 6 -> 8 (zero rows; sublane-aligned storage)
H = 512         # hidden width
N_OUT = 3       # true output width
N_PAD = 8       # output columns padded 3 -> 8 (full last dim of the out array)
TB_CAP = 2048   # max batch-tile rows per grid step


def _round_up(x, m):
    return (x + m - 1) // m * m


def _choose_tb(batch):
    """Batch-tile rows: as large as possible (amortizes ~0.35us/step grid
    overhead), but at least two grid steps once batch >= 16 so the 'parallel'
    batch axis can split across both TensorCores on v7x."""
    if batch >= 16:
        tb = _round_up(pl.cdiv(batch, 2), 8)
    else:
        tb = _round_up(max(batch, 1), 8)
    return min(TB_CAP, tb)


def _mlp_kernel(x_ref, w1_ref, b1_ref, w2_ref, b2_ref, w3_ref, b3_ref, o_ref):
    # Layer 1: Linear(6->512) + ReLU.  x is (TB, 6) f32; w1 is stored (8, 512)
    # f32 with zero rows 6..7 and sliced back to K=6 here (the stored zero rows
    # keep the matmul robust to contracting-dim padding).  Dropout(0.5) layers
    # are the identity in eval/inference mode.
    h1 = jnp.dot(x_ref[...], w1_ref[pl.ds(0, K_IN), :],
                 preferred_element_type=jnp.float32)              # (TB, 512)
    # Fused bias + ReLU + bf16 cast: the f32 activations never round-trip VMEM
    # alongside a separate bf16 copy.
    h1 = jnp.maximum(h1 + b1_ref[...], 0.0).astype(jnp.bfloat16)

    # Layer 2: Linear(512->512) + ReLU, bf16 operands, f32 MXU accumulation.
    h2 = jnp.dot(h1, w2_ref[...], preferred_element_type=jnp.float32)
    h2 = jnp.maximum(h2 + b2_ref[...], 0.0).astype(jnp.bfloat16)

    # Layer 3: Linear(512->3), output padded to 8 lanes (full out block dim).
    out = jnp.dot(h2, w3_ref[...], preferred_element_type=jnp.float32)
    o_ref[...] = (out + b3_ref[...]).astype(o_ref.dtype)          # (TB, 8)


def neural_network_forward(x, params):
    """x: (B, ...) flattening to 6 features. Returns logits (B, 3) float32."""
    w1, b1, w2, b2, w3, b3 = params
    B = x.shape[0]
    x_flat = x.reshape(B, -1).astype(jnp.float32)                 # nn.Flatten()
    assert x_flat.shape[1] == K_IN, (
        f"expected {K_IN} flattened features, got {x_flat.shape[1]}")

    TB = _choose_tb(B)
    grid = (pl.cdiv(B, TB),)          # ragged last block is clipped by Pallas

    out_shape = jax.ShapeDtypeStruct((B, N_PAD), jnp.float32)

    # Weights/biases: full-array blocks with constant index_map -> resident in
    # VMEM across all grid steps (loaded once per call / per core).
    resident = lambda a: pl.BlockSpec(a.shape, lambda i: (0,) * a.ndim)

    # VMEM budget: resident weights/biases (x2 default buffering),
    # double-buffered x/out tiles, plus a few (TB, 512) f32 activation temps.
    resident_bytes = sum(int(a.size) * a.dtype.itemsize for a in params)
    io_bytes = TB * (K_IN * 4 + N_PAD * 4)
    act_bytes = 6 * TB * H * 4
    vmem_limit = 2 * resident_bytes + 2 * io_bytes + act_bytes + (2 << 20)
    vmem_limit = int(min(max(vmem_limit, 8 << 20), 64 << 20))

    # Advisory cost estimate using the true (unpadded) dimensions.
    flops = 2 * B * (K_IN * H + H * H + H * N_OUT)
    bytes_accessed = int(x_flat.size) * 4 + B * N_PAD * 4 + resident_bytes

    out = pl.pallas_call(
        _mlp_kernel,
        out_shape=out_shape,
        grid=grid,
        in_specs=[
            pl.BlockSpec((TB, K_IN), lambda i: (i, 0)),   # x tile, unpadded
            resident(w1), resident(b1),
            resident(w2), resident(b2),
            resident(w3), resident(b3),
        ],
        out_specs=pl.BlockSpec((TB, N_PAD), lambda i: (i, 0)),
        compiler_params=pltpu.CompilerParams(
            dimension_semantics=("parallel",),
            vmem_limit_bytes=vmem_limit,
        ),
        cost_estimate=pl.CostEstimate(
            flops=flops, transcendentals=0, bytes_accessed=bytes_accessed),
    )(x_flat, w1, b1, w2, b2, w3, b3)

    return out[:, :N_OUT]


def init_params(key):
    """Deterministic init matching nn.Linear's shapes.

    PyTorch nn.Linear(in, out) stores weight as (out, in); we store the
    transposed (in, out) so the kernel computes x @ W + b.
      w1: (8, 512)   f32, rows 6..7 zero
      w2: (512, 512) bf16
      w3: (512, 8)   bf16, cols 3..7 zero
      biases: f32, shape (1, out) for clean 2-D broadcast; b3 padded to 8.
    """
    k1, k2, k3, k4, k5, k6 = jax.random.split(key, 6)

    def linear_init(kw, kb, fan_in, fan_out):
        bound = 1.0 / jnp.sqrt(fan_in)
        w = jax.random.uniform(kw, (fan_in, fan_out), jnp.float32, -bound, bound)
        b = jax.random.uniform(kb, (1, fan_out), jnp.float32, -bound, bound)
        return w, b

    w1, b1 = linear_init(k1, k2, K_IN, H)
    w2, b2 = linear_init(k3, k4, H, H)
    w3, b3 = linear_init(k5, k6, H, N_OUT)

    w1p = jnp.pad(w1, ((0, K_PAD - K_IN), (0, 0)))                 # f32 (8,512)
    w2p = w2.astype(jnp.bfloat16)
    w3p = jnp.pad(w3, ((0, 0), (0, N_PAD - N_OUT))).astype(jnp.bfloat16)
    b3p = jnp.pad(b3, ((0, 0), (0, N_PAD - N_OUT)))
    return (w1p, b1, w2p, b2, w3p, b3p)


if __name__ == "__main__":
    key = jax.random.PRNGKey(0)
    pkey, xkey = jax.random.split(key)

    params = init_params(pkey)

    # Small input consistent with the module: batch=8, flattens to 6 features.
    x = jax.random.normal(xkey, (8, 2, 3), dtype=jnp.float32)

    logits = neural_network_forward(x, params)
    logits = jax.block_until_ready(logits)

    # Plain-JAX reference using the same (bf16-quantized) weights and the same
    # precision path as the kernel (bf16 operands for layers 2/3, f32 accum).
    w1, b1, w2, b2, w3, b3 = params
    x_flat = x.reshape(x.shape[0], -1)
    h = jnp.maximum(
        jnp.dot(x_flat, w1[:K_IN], preferred_element_type=jnp.float32) + b1,
        0.0).astype(jnp.bfloat16)
    h = jnp.maximum(
        jnp.dot(h, w2, preferred_element_type=jnp.float32) + b2,
        0.0).astype(jnp.bfloat16)
    ref = (jnp.dot(h, w3, preferred_element_type=jnp.float32) + b3)[:, :N_OUT]

    assert logits.shape == (8, 3), logits.shape
    max_err = jnp.max(jnp.abs(logits - ref))
    assert jnp.allclose(logits, ref, atol=1e-2, rtol=1e-2), max_err

    print("KERNEL_OK")
</pallas_src>

<mosaic_0001>
module attributes {stable_mosaic.version = 11 : i64} {
  func.func @_mlp_kernel(%arg0: i32, %arg1: memref<8x6xf32, #tpu.memory_space<vmem>>, %arg2: memref<8x512xf32, #tpu.memory_space<vmem>>, %arg3: memref<1x512xf32, #tpu.memory_space<vmem>>, %arg4: memref<512x512xbf16, #tpu.memory_space<vmem>>, %arg5: memref<1x512xf32, #tpu.memory_space<vmem>>, %arg6: memref<512x8xbf16, #tpu.memory_space<vmem>>, %arg7: memref<1x8xf32, #tpu.memory_space<vmem>>, %arg8: memref<8x8xf32, #tpu.memory_space<vmem>>) attributes {dimension_semantics = [#tpu.dimension_semantics<parallel>], iteration_bounds = array<i64: 1>, scalar_prefetch = 0 : i64, scratch_operands = 0 : i64, tpu.core_type = #tpu.core_type<tc>, window_params = [{transform_indices = @transform_0, window_bounds = array<i64: 8, 6>}, {pipeline_mode = #tpu.pipeline_mode<synchronous>, transform_indices = @transform_1, window_bounds = array<i64: 8, 512>}, {pipeline_mode = #tpu.pipeline_mode<synchronous>, transform_indices = @transform_2, window_bounds = array<i64: 1, 512>}, {pipeline_mode = #tpu.pipeline_mode<synchronous>, transform_indices = @transform_3, window_bounds = array<i64: 512, 512>}, {pipeline_mode = #tpu.pipeline_mode<synchronous>, transform_indices = @transform_4, window_bounds = array<i64: 1, 512>}, {pipeline_mode = #tpu.pipeline_mode<synchronous>, transform_indices = @transform_5, window_bounds = array<i64: 512, 8>}, {pipeline_mode = #tpu.pipeline_mode<synchronous>, transform_indices = @transform_6, window_bounds = array<i64: 1, 8>}, {transform_indices = @transform_7, window_bounds = array<i64: 8, 8>}]} {
    %c0 = arith.constant 0 : index
    %c0_0 = arith.constant 0 : index
    %0 = vector.load %arg1[%c0, %c0_0] : memref<8x6xf32, #tpu.memory_space<vmem>>, vector<8x6xf32>
    %c0_1 = arith.constant 0 : index
    %c0_2 = arith.constant 0 : index
    %1 = vector.load %arg2[%c0_1, %c0_2] : memref<8x512xf32, #tpu.memory_space<vmem>>, vector<6x512xf32>
    %cst = arith.constant dense<0.000000e+00> : vector<8x512xf32>
    %2 = tpu.matmul %0, %1, %cst {dimension_numbers = #tpu.dot_dimension_numbers<[1], [0], [0], [1], [0, 0, 1, 1], [], []>} : vector<8x6xf32>, vector<6x512xf32>, vector<8x512xf32> -> vector<8x512xf32>
    %c0_3 = arith.constant 0 : index
    %c0_4 = arith.constant 0 : index
    %3 = vector.load %arg3[%c0_3, %c0_4] : memref<1x512xf32, #tpu.memory_space<vmem>>, vector<1x512xf32>
    %4 = vector.broadcast %3 : vector<1x512xf32> to vector<8x512xf32>
    %5 = arith.addf %2, %4 : vector<8x512xf32>
    %cst_5 = arith.constant 0.000000e+00 : f32
    %6 = vector.broadcast %cst_5 : f32 to vector<8x512xf32>
    %7 = arith.maximumf %5, %6 : vector<8x512xf32>
    %8 = arith.truncf %7 : vector<8x512xf32> to vector<8x512xbf16>
    %c0_6 = arith.constant 0 : index
    %c0_7 = arith.constant 0 : index
    %9 = vector.load %arg4[%c0_6, %c0_7] : memref<512x512xbf16, #tpu.memory_space<vmem>>, vector<512x512xbf16>
    %cst_8 = arith.constant dense<0.000000e+00> : vector<8x512xf32>
    %10 = tpu.matmul %8, %9, %cst_8 {dimension_numbers = #tpu.dot_dimension_numbers<[1], [0], [0], [1], [0, 0, 1, 1], [], []>} : vector<8x512xbf16>, vector<512x512xbf16>, vector<8x512xf32> -> vector<8x512xf32>
    %c0_9 = arith.constant 0 : index
    %c0_10 = arith.constant 0 : index
    %11 = vector.load %arg5[%c0_9, %c0_10] : memref<1x512xf32, #tpu.memory_space<vmem>>, vector<1x512xf32>
    %12 = vector.broadcast %11 : vector<1x512xf32> to vector<8x512xf32>
    %13 = arith.addf %10, %12 : vector<8x512xf32>
    %cst_11 = arith.constant 0.000000e+00 : f32
    %14 = vector.broadcast %cst_11 : f32 to vector<8x512xf32>
    %15 = arith.maximumf %13, %14 : vector<8x512xf32>
    %16 = arith.truncf %15 : vector<8x512xf32> to vector<8x512xbf16>
    %c0_12 = arith.constant 0 : index
    %c0_13 = arith.constant 0 : index
    %17 = vector.load %arg6[%c0_12, %c0_13] : memref<512x8xbf16, #tpu.memory_space<vmem>>, vector<512x8xbf16>
    %cst_14 = arith.constant dense<0.000000e+00> : vector<8x8xf32>
    %18 = tpu.matmul %16, %17, %cst_14 {dimension_numbers = #tpu.dot_dimension_numbers<[1], [0], [0], [1], [0, 0, 1, 1], [], []>} : vector<8x512xbf16>, vector<512x8xbf16>, vector<8x8xf32> -> vector<8x8xf32>
    %c0_15 = arith.constant 0 : index
    %c0_16 = arith.constant 0 : index
    %19 = vector.load %arg7[%c0_15, %c0_16] : memref<1x8xf32, #tpu.memory_space<vmem>>, vector<1x8xf32>
    %20 = vector.broadcast %19 : vector<1x8xf32> to vector<8x8xf32>
    %21 = arith.addf %18, %20 : vector<8x8xf32>
    %c0_17 = arith.constant 0 : index
    %c0_18 = arith.constant 0 : index
    %22 = vector.load %arg8[%c0_17, %c0_18] : memref<8x8xf32, #tpu.memory_space<vmem>>, vector<8x8xf32>
    tpu.vector_store %arg8[%c0_17, %c0_18], %21 {strides = array<i32>} : memref<8x8xf32, #tpu.memory_space<vmem>>, vector<8x8xf32>,
    return
  }
  func.func @transform_0(%arg0: i32) -> (i32, i32) {
    %c0_i32 = arith.constant 0 : i32
    %c0_i32_0 = arith.constant 0 : i32
    return %arg0, %c0_i32 : i32, i32
  }
  func.func @transform_1(%arg0: i32) -> (i32, i32) {
    %c0_i32 = arith.constant 0 : i32
    %c0_i32_0 = arith.constant 0 : i32
    %c0_i32_1 = arith.constant 0 : i32
    return %c0_i32, %c0_i32_0 : i32, i32
  }
  func.func @transform_2(%arg0: i32) -> (i32, i32) {
    %c0_i32 = arith.constant 0 : i32
    %c0_i32_0 = arith.constant 0 : i32
    %c0_i32_1 = arith.constant 0 : i32
    return %c0_i32, %c0_i32_0 : i32, i32
  }
  func.func @transform_3(%arg0: i32) -> (i32, i32) {
    %c0_i32 = arith.constant 0 : i32
    %c0_i32_0 = arith.constant 0 : i32
    %c0_i32_1 = arith.constant 0 : i32
    return %c0_i32, %c0_i32_0 : i32, i32
  }
  func.func @transform_4(%arg0: i32) -> (i32, i32) {
    %c0_i32 = arith.constant 0 : i32
    %c0_i32_0 = arith.constant 0 : i32
    %c0_i32_1 = arith.constant 0 : i32
    return %c0_i32, %c0_i32_0 : i32, i32
  }
  func.func @transform_5(%arg0: i32) -> (i32, i32) {
    %c0_i32 = arith.constant 0 : i32
    %c0_i32_0 = arith.constant 0 : i32
    %c0_i32_1 = arith.constant 0 : i32
    return %c0_i32, %c0_i32_0 : i32, i32
  }
  func.func @transform_6(%arg0: i32) -> (i32, i32) {
    %c0_i32 = arith.constant 0 : i32
    %c0_i32_0 = arith.constant 0 : i32
    %c0_i32_1 = arith.constant 0 : i32
    return %c0_i32, %c0_i32_0 : i32, i32
  }
  func.func @transform_7(%arg0: i32) -> (i32, i32) {
    %c0_i32 = arith.constant 0 : i32
    %c0_i32_0 = arith.constant 0 : i32
    return %arg0, %c0_i32 : i32, i32
  }
}

</mosaic_0001>

<llo_original>
// kernel: tpu_custom_call.1
$region0: #{tpu_custom_call.1}
  #allocation0 [shape = 'u32[]', space=smem, size = 0x4, offset = 0x4, fixed_abs, tag = 'smem constant byte address 0x4 - core index']
  #allocation1 [shape = 'u32[144,128]{1,0:T(1,128)}', space=vmem, size = 0x12000, scoped, tag = 'internal scratch']
  %s0 = inlined_call_operand.vmem [shape: f32[8,6], index: 0, kind: input, shape index: {}]
  %s1 = inlined_call_operand.vmem [shape: f32[8,512], index: 1, kind: input, shape index: {}]
  %s2 = inlined_call_operand.vmem [shape: f32[1,512], index: 2, kind: input, shape index: {}]
  %s3 = inlined_call_operand.hbm [shape: bf16[512,512], index: 3, kind: input, shape index: {}]
  %s4 = inlined_call_operand.vmem [shape: f32[1,512], index: 4, kind: input, shape index: {}]
  %s5 = inlined_call_operand.vmem [shape: bf16[512,8], index: 5, kind: input, shape index: {}]
  %s6 = inlined_call_operand.vmem [shape: f32[1,8], index: 6, kind: input, shape index: {}]
  %s7 = inlined_call_operand.hbm [shape: f32[8,8], index: 7, kind: output, shape index: {}]
  %s8 = sld [smem:[#allocation0]]
  $region42: #{tpu_custom_call.1} parent=0
    _
  %s10 = ssub.s32 1, %s8
  %s11 = scalar_select 0, %s10, %s8
  $region1: #{tpu_custom_call.1} parent=0
    #allocation2 [shape = 'u8[524288]{0}', space=vmem, size = 0x80000, scoped, tag = 'input window, operand 3, single buffered']
    #allocation3 [shape = 's32[1]{0}', space=sflag, size = 0x4, scoped, tag = 'scoped memory for tpu_custom_call.1']
    #allocation4 [shape = 's32[1]{0}', space=sflag, size = 0x4, scoped, tag = 'scoped memory for tpu_custom_call.1']
    #allocation5 [shape = 'u8[4096]{0}', space=vmem, size = 0x1000, scoped, tag = 'output window, operand 0, single buffered']
    %12 = vsyncpa [#allocation3], 0
    %13 = vsyncpa [#allocation4], 0
    // Predicated region
    $region2: #{tpu_custom_call.1} parent=1 // pred_check
      _
    $region3: #{tpu_custom_call.1} parent=1 // pred_check_branch
      %15 = sbr.rel (0) target = $region5
    $region4: #{tpu_custom_call.1} parent=1 // pred_region
      _
    $region5: #{tpu_custom_call.1} parent=1 // pred_fallthru
      _
    // Predicated region
    $region6: #{tpu_custom_call.1} parent=1 // pred_check
      _
    $region7: #{tpu_custom_call.1} parent=1 // pred_check_branch
      %17 = sbr.rel (0) target = $region9
    $region8: #{tpu_custom_call.1} parent=1 // pred_region
      _
    $region9: #{tpu_custom_call.1} parent=1 // pred_fallthru
      _
    // Predicated region
    $region10: #{tpu_custom_call.1} parent=1 // pred_check
      _
    $region11: #{tpu_custom_call.1} parent=1 // pred_check_branch
      %19 = sbr.rel (0) target = $region13
    $region12: #{tpu_custom_call.1} parent=1 // pred_region
      _
    $region13: #{tpu_custom_call.1} parent=1 // pred_fallthru
      _
    // Predicated region
    $region14: #{tpu_custom_call.1} parent=1 // pred_check
      _
    $region15: #{tpu_custom_call.1} parent=1 // pred_check_branch
      %21 = sbr.rel (0) target = $region17
    $region16: #{tpu_custom_call.1} parent=1 // pred_region
      %s23 = ssub.s32 16384, 16384
      %24 = vsyncadd [#allocation3], %s23
      %s25 = sshll.u32 [#allocation2], 4
      %s26 = int_to_ptr.vmem [resolvable:$true] %s25
      %31 = dma.hbm_to_vmem [thread:$0]  %s3, 16384, %s26, [#allocation3], 256, 256, 16
    $region17: #{tpu_custom_call.1} parent=1 // pred_fallthru
      _
    // Predicated region
    $region18: #{tpu_custom_call.1} parent=1 // pred_check
      _
    $region19: #{tpu_custom_call.1} parent=1 // pred_check_branch
      %33 = sbr.rel (0) target = $region21
    $region20: #{tpu_custom_call.1} parent=1 // pred_region
      _
    $region21: #{tpu_custom_call.1} parent=1 // pred_fallthru
      _
    // Predicated region
    $region22: #{tpu_custom_call.1} parent=1 // pred_check
      _
    $region23: #{tpu_custom_call.1} parent=1 // pred_check_branch
      %35 = sbr.rel (0) target = $region25
    $region24: #{tpu_custom_call.1} parent=1 // pred_region
      _
    $region25: #{tpu_custom_call.1} parent=1 // pred_fallthru
      _
    // Predicated region
    $region26: #{tpu_custom_call.1} parent=1 // pred_check
      _
    $region27: #{tpu_custom_call.1} parent=1 // pred_check_branch
      %37 = sbr.rel (0) target = $region29
    $region28: #{tpu_custom_call.1} parent=1 // pred_region
      _
    $region29: #{tpu_custom_call.1} parent=1 // pred_fallthru
      _
    // Predicated region
    $region30: #{tpu_custom_call.1} parent=1 // pred_check
      _
    $region31: #{tpu_custom_call.1} parent=1 // pred_check_branch
      %39 = sbr.rel (0) target = $region33
    $region32: #{tpu_custom_call.1} parent=1 // pred_region
      %40 = dma.done [#allocation3], 16384
    $region33: #{tpu_custom_call.1} parent=1 // pred_fallthru
      _
    %v42 = vld [vmem:[%s0] sm:$0xff]
    %v43 = vld [vmem:[%s1] sm:$0x3f]
    %v44 = vld [vmem:[%s1 + $0x8] sm:$0x3f]
    %v45 = vld [vmem:[%s1 + $0x10] sm:$0x3f]
    %v46 = vld [vmem:[%s1 + $0x18] sm:$0x3f]
    %v47 = vld [vmem:[%s2] sm:$0xf]
    %v49 = vlaneseq
    %v50 = vshrl.u32 %v49, 7
    %v51 = vsub.s32 0, %v50
    %v52 = vrot.slane %v47, %v51
    %v53 = vlaneseq
    %v54 = vshrl.u32 %v53, 7
    %v55 = vsub.s32 1, %v54
    %v56 = vrot.slane %v47, %v55
    %v57 = vlaneseq
    %v58 = vshrl.u32 %v57, 7
    %v59 = vsub.s32 2, %v58
    %v60 = vrot.slane %v47, %v59
    %v61 = vlaneseq
    %v62 = vshrl.u32 %v61, 7
    %v63 = vsub.s32 3, %v62
    %v64 = vrot.slane %v47, %v63
    %vm69 = vcmask 48128
    %v71 = vsel %vm69, %v42, 0
    %vm73 = vcmask 1045504
    %v75 = vsel %vm73, %v43, 0
    %v78 = vsel %vm73, %v44, 0
    %v81 = vsel %vm73, %v45, 0
    %v84 = vsel %vm73, %v46, 0
    %86 = vmatprep.subr.mxu0 %v78
    %87 = vmatpush1.msra.mxu0 %v75
    %88 = vmatprep.subr.mxu0 0.0
    %89 = vmatpush1.msra.mxu0 0.0
    %90 = vmatprep.subr.mxu0 0.0
    %91 = vmatpush1.msra.mxu0 0.0
    %92 = vmatprep.subr.mxu0 0.0
    %93 = vmatpush1.msra.mxu0 0.0
    %94 = vmatprep.subr.mxu0 0.0
    %95 = vmatpush1.msra.mxu0 0.0
    %96 = vmatprep.subr.mxu0 0.0
    %97 = vmatpush1.msra.mxu0 0.0
    %98 = vmatprep.subr.mxu0 0.0
    %99 = vmatpush1.msra.mxu0 0.0
    %100 = vmatprep.subr.mxu0 0.0
    %101 = vmatpush1.msra.mxu0 0.0
    %102 = vmatprep.subr.mxu0 0.0
    %103 = vmatpush1.msra.mxu0 0.0
    %104 = vmatprep.subr.mxu0 0.0
    %105 = vmatpush1.msra.mxu0 0.0
    %106 = vmatprep.subr.mxu0 0.0
    %107 = vmatpush1.msra.mxu0 0.0
    %108 = vmatprep.subr.mxu0 0.0
    %109 = vmatpush1.msra.mxu0 0.0
    %110 = vmatprep.subr.mxu0 0.0
    %111 = vmatpush1.msra.mxu0 0.0
    %112 = vmatprep.subr.mxu0 0.0
    %113 = vmatpush1.msra.mxu0 0.0
    %114 = vmatprep.subr.mxu0 0.0
    %115 = vmatpush1.msra.mxu0 0.0
    %116 = vmatprep.subr.mxu0 0.0
    %117 = vmatpush1.msra.mxu0 0.0
    %118 = vmatprep.subr.mxu0 0.0
    %119 = vmatpush1.msra.mxu0 0.0
    %120 = vmatprep.subr.mxu0 0.0
    %121 = vmatpush1.msra.mxu0 0.0
    %122 = vmatprep.subr.mxu0 0.0
    %123 = vmatpush1.msra.mxu0 0.0
    %124 = vmatprep.subr.mxu0 0.0
    %125 = vmatpush1.msra.mxu0 0.0
    %126 = vmatprep.subr.mxu0 0.0
    %127 = vmatpush1.msra.mxu0 0.0
    %128 = vmatprep.subr.mxu0 0.0
    %129 = vmatpush1.msra.mxu0 0.0
    %130 = vmatprep.subr.mxu0 0.0
    %131 = vmatpush1.msra.mxu0 0.0
    %132 = vmatprep.subr.mxu0 0.0
    %133 = vmatpush1.msra.mxu0 0.0
    %134 = vmatprep.subr.mxu0 0.0
    %135 = vmatpush1.msra.mxu0 0.0
    %136 = vmatprep.subr.mxu0 0.0
    %137 = vmatpush1.msra.mxu0 0.0
    %138 = vmatprep.subr.mxu0 0.0
    %139 = vmatpush1.msra.mxu0 0.0
    %140 = vmatprep.subr.mxu0 0.0
    %141 = vmatpush1.msra.mxu0 0.0
    %142 = vmatprep.subr.mxu0 0.0
    %143 = vmatpush1.msra.mxu0 0.0
    %144 = vmatprep.subr.mxu0 0.0
    %145 = vmatpush1.msra.mxu0 0.0
    %146 = vmatprep.subr.mxu0 0.0
    %147 = vmatpush1.msra.mxu0 0.0
    %148 = vmatprep.subr.mxu0 0.0
    %149 = vmatpush1.msra.mxu0 0.0
    %150 = vmatprep.mubr.f32.mxu0 0.0
    %151 = vmatmul.mubr.f32.gmra.mrb[0].mxu0 %v71
    %v152 = vpop.f32.mrb[0].mxu0
    %v153 = vadd.f32 %v52, %v152
    %v154 = vpop.f32.mrb[0].mxu0
    %v155 = vadd.f32 %v56, %v154
    %156 = vdwg.mxu0
    %157 = vmatprep.subr.mxu0 %v84
    %158 = vmatpush1.msra.mxu0 %v81
    %159 = vmatprep.subr.mxu0 0.0
    %160 = vmatpush1.msra.mxu0 0.0
    %161 = vmatprep.subr.mxu0 0.0
    %162 = vmatpush1.msra.mxu0 0.0
    %163 = vmatprep.subr.mxu0 0.0
    %164 = vmatpush1.msra.mxu0 0.0
    %165 = vmatprep.subr.mxu0 0.0
    %166 = vmatpush1.msra.mxu0 0.0
    %167 = vmatprep.subr.mxu0 0.0
    %168 = vmatpush1.msra.mxu0 0.0
    %169 = vmatprep.subr.mxu0 0.0
    %170 = vmatpush1.msra.mxu0 0.0
    %171 = vmatprep.subr.mxu0 0.0
    %172 = vmatpush1.msra.mxu0 0.0
    %173 = vmatprep.subr.mxu0 0.0
    %174 = vmatpush1.msra.mxu0 0.0
    %175 = vmatprep.subr.mxu0 0.0
    %176 = vmatpush1.msra.mxu0 0.0
    %177 = vmatprep.subr.mxu0 0.0
    %178 = vmatpush1.msra.mxu0 0.0
    %179 = vmatprep.subr.mxu0 0.0
    %180 = vmatpush1.msra.mxu0 0.0
    %181 = vmatprep.subr.mxu0 0.0
    %182 = vmatpush1.msra.mxu0 0.0
    %183 = vmatprep.subr.mxu0 0.0
    %184 = vmatpush1.msra.mxu0 0.0
    %185 = vmatprep.subr.mxu0 0.0
    %186 = vmatpush1.msra.mxu0 0.0
    %187 = vmatprep.subr.mxu0 0.0
    %188 = vmatpush1.msra.mxu0 0.0
    %189 = vmatprep.subr.mxu0 0.0
    %190 = vmatpush1.msra.mxu0 0.0
    %191 = vmatprep.subr.mxu0 0.0
    %192 = vmatpush1.msra.mxu0 0.0
    %193 = vmatprep.subr.mxu0 0.0
    %194 = vmatpush1.msra.mxu0 0.0
    %195 = vmatprep.subr.mxu0 0.0
    %196 = vmatpush1.msra.mxu0 0.0
    %197 = vmatprep.subr.mxu0 0.0
    %198 = vmatpush1.msra.mxu0 0.0
    %199 = vmatprep.subr.mxu0 0.0
    %200 = vmatpush1.msra.mxu0 0.0
    %201 = vmatprep.subr.mxu0 0.0
    %202 = vmatpush1.msra.mxu0 0.0
    %203 = vmatprep.subr.mxu0 0.0
    %204 = vmatpush1.msra.mxu0 0.0
    %205 = vmatprep.subr.mxu0 0.0
    %206 = vmatpush1.msra.mxu0 0.0
    %207 = vmatprep.subr.mxu0 0.0
    %208 = vmatpush1.msra.mxu0 0.0
    %209 = vmatprep.subr.mxu0 0.0
    %210 = vmatpush1.msra.mxu0 0.0
    %211 = vmatprep.subr.mxu0 0.0
    %212 = vmatpush1.msra.mxu0 0.0
    %213 = vmatprep.subr.mxu0 0.0
    %214 = vmatpush1.msra.mxu0 0.0
    %215 = vmatprep.subr.mxu0 0.0
    %216 = vmatpush1.msra.mxu0 0.0
    %217 = vmatprep.subr.mxu0 0.0
    %218 = vmatpush1.msra.mxu0 0.0
    %219 = vmatprep.subr.mxu0 0.0
    %220 = vmatpush1.msra.mxu0 0.0
    %221 = vmatprep.mubr.f32.mxu0 0.0
    %222 = vmatmul.mubr.f32.gmra.mrb[0].mxu0 %v71
    %v223 = vpop.f32.mrb[0].mxu0
    %v224 = vadd.f32 %v60, %v223
    %v225 = vpop.f32.mrb[0].mxu0
    %v226 = vadd.f32 %v64, %v225
    %227 = vdwg.mxu0
    %v228 = vmax.f32 %v153, 0.0
    %v229 = vmax.f32 %v155, 0.0
    %v230 = vmax.f32 %v224, 0.0
    %v231 = vmax.f32 %v226, 0.0
    %v232 = vpack.c.bf16 %v228, %v228
    %v233 = vpack.c.bf16 %v229, %v229
    %v234 = vpack.c.bf16 %v230, %v230
    %v235 = vpack.c.bf16 %v231, %v231
    %v236 = vld [vmem:[#allocation2] sm:$0xff]
    %v237 = vld [vmem:[#allocation2 + $0x8] sm:$0xff]
    %v238 = vld [vmem:[#allocation2 + $0x10] sm:$0xff]
    %v239 = vld [vmem:[#allocation2 + $0x18] sm:$0xff]
    %v240 = vld [vmem:[#allocation2 + $0x20] sm:$0xff]
    %v241 = vld [vmem:[#allocation2 + $0x28] sm:$0xff]
    %v242 = vld [vmem:[#allocation2 + $0x30] sm:$0xff]
    %v243 = vld [vmem:[#allocation2 + $0x38] sm:$0xff]
    %v244 = vld [vmem:[#allocation2 + $0x40] sm:$0xff]
    %v245 = vld [vmem:[#allocation2 + $0x48] sm:$0xff]
    %v246 = vld [vmem:[#allocation2 + $0x50] sm:$0xff]
    %v247 = vld [vmem:[#allocation2 + $0x58] sm:$0xff]
    %v248 = vld [vmem:[#allocation2 + $0x60] sm:$0xff]
    %v249 = vld [vmem:[#allocation2 + $0x68] sm:$0xff]
    %v250 = vld [vmem:[#allocation2 + $0x70] sm:$0xff]
    %v251 = vld [vmem:[#allocation2 + $0x78] sm:$0xff]
    %v252 = vld [vmem:[#allocation2 + $0x80] sm:$0xff]
    %v253 = vld [vmem:[#allocation2 + $0x88] sm:$0xff]
    %v254 = vld [vmem:[#allocation2 + $0x90] sm:$0xff]
    %v255 = vld [vmem:[#allocation2 + $0x98] sm:$0xff]
    %v256 = vld [vmem:[#allocation2 + $0xa0] sm:$0xff]
    %v257 = vld [vmem:[#allocation2 + $0xa8] sm:$0xff]
    %v258 = vld [vmem:[#allocation2 + $0xb0] sm:$0xff]
    %v259 = vld [vmem:[#allocation2 + $0xb8] sm:$0xff]
    %v260 = vld [vmem:[#allocation2 + $0xc0] sm:$0xff]
    %v261 = vld [vmem:[#allocation2 + $0xc8] sm:$0xff]
    %v262 = vld [vmem:[#allocation2 + $0xd0] sm:$0xff]
    %v263 = vld [vmem:[#allocation2 + $0xd8] sm:$0xff]
    %v264 = vld [vmem:[#allocation2 + $0xe0] sm:$0xff]
    %v265 = vld [vmem:[#allocation2 + $0xe8] sm:$0xff]
    %v266 = vld [vmem:[#allocation2 + $0xf0] sm:$0xff]
    %v267 = vld [vmem:[#allocation2 + $0xf8] sm:$0xff]
    %v268 = vld [vmem:[#allocation2 + $0x100] sm:$0xff]
    %v269 = vld [vmem:[#allocation2 + $0x108] sm:$0xff]
    %v270 = vld [vmem:[#allocation2 + $0x110] sm:$0xff]
    %v271 = vld [vmem:[#allocation2 + $0x118] sm:$0xff]
    %v272 = vld [vmem:[#allocation2 + $0x120] sm:$0xff]
    %v273 = vld [vmem:[#allocation2 + $0x128] sm:$0xff]
    %v274 = vld [vmem:[#allocation2 + $0x130] sm:$0xff]
    %v275 = vld [vmem:[#allocation2 + $0x138] sm:$0xff]
    %v276 = vld [vmem:[#allocation2 + $0x140] sm:$0xff]
    %v277 = vld [vmem:[#allocation2 + $0x148] sm:$0xff]
    %v278 = vld [vmem:[#allocation2 + $0x150] sm:$0xff]
    %v279 = vld [vmem:[#allocation2 + $0x158] sm:$0xff]
    %v280 = vld [vmem:[#allocation2 + $0x160] sm:$0xff]
    %v281 = vld [vmem:[#allocation2 + $0x168] sm:$0xff]
    %v282 = vld [vmem:[#allocation2 + $0x170] sm:$0xff]
    %v283 = vld [vmem:[#allocation2 + $0x178] sm:$0xff]
    %v284 = vld [vmem:[#allocation2 + $0x180] sm:$0xff]
    %v285 = vld [vmem:[#allocation2 + $0x188] sm:$0xff]
    %v286 = vld [vmem:[#allocation2 + $0x190] sm:$0xff]
    %v287 = vld [vmem:[#allocation2 + $0x198] sm:$0xff]
    %v288 = vld [vmem:[#allocation2 + $0x1a0] sm:$0xff]
    %v289 = vld [vmem:[#allocation2 + $0x1a8] sm:$0xff]
    %v290 = vld [vmem:[#allocation2 + $0x1b0] sm:$0xff]
    %v291 = vld [vmem:[#allocation2 + $0x1b8] sm:$0xff]
    %v292 = vld [vmem:[#allocation2 + $0x1c0] sm:$0xff]
    %v293 = vld [vmem:[#allocation2 + $0x1c8] sm:$0xff]
    %v294 = vld [vmem:[#allocation2 + $0x1d0] sm:$0xff]
    %v295 = vld [vmem:[#allocation2 + $0x1d8] sm:$0xff]
    %v296 = vld [vmem:[#allocation2 + $0x1e0] sm:$0xff]
    %v297 = vld [vmem:[#allocation2 + $0x1e8] sm:$0xff]
    %v298 = vld [vmem:[#allocation2 + $0x1f0] sm:$0xff]
    %v299 = vld [vmem:[#allocation2 + $0x1f8] sm:$0xff]
    %v300 = vld [vmem:[#allocation2 + $0x200] sm:$0xff]
    %v301 = vld [vmem:[#allocation2 + $0x208] sm:$0xff]
    %v302 = vld [vmem:[#allocation2 + $0x210] sm:$0xff]
    %v303 = vld [vmem:[#allocation2 + $0x218] sm:$0xff]
    %v304 = vld [vmem:[#allocation2 + $0x220] sm:$0xff]
    %v305 = vld [vmem:[#allocation2 + $0x228] sm:$0xff]
    %v306 = vld [vmem:[#allocation2 + $0x230] sm:$0xff]
    %v307 = vld [vmem:[#allocation2 + $0x238] sm:$0xff]
    %v308 = vld [vmem:[#allocation2 + $0x240] sm:$0xff]
    %v309 = vld [vmem:[#allocation2 + $0x248] sm:$0xff]
    %v310 = vld [vmem:[#allocation2 + $0x250] sm:$0xff]
    %v311 = vld [vmem:[#allocation2 + $0x258] sm:$0xff]
    %v312 = vld [vmem:[#allocation2 + $0x260] sm:$0xff]
    %v313 = vld [vmem:[#allocation2 + $0x268] sm:$0xff]
    %v314 = vld [vmem:[#allocation2 + $0x270] sm:$0xff]
    %v315 = vld [vmem:[#allocation2 + $0x278] sm:$0xff]
    %v316 = vld [vmem:[#allocation2 + $0x280] sm:$0xff]
    %v317 = vld [vmem:[#allocation2 + $0x288] sm:$0xff]
    %v318 = vld [vmem:[#allocation2 + $0x290] sm:$0xff]
    %v319 = vld [vmem:[#allocation2 + $0x298] sm:$0xff]
    %v320 = vld [vmem:[#allocation2 + $0x2a0] sm:$0xff]
    %v321 = vld [vmem:[#allocation2 + $0x2a8] sm:$0xff]
    %v322 = vld [vmem:[#allocation2 + $0x2b0] sm:$0xff]
    %v323 = vld [vmem:[#allocation2 + $0x2b8] sm:$0xff]
    %v324 = vld [vmem:[#allocation2 + $0x2c0] sm:$0xff]
    %v325 = vld [vmem:[#allocation2 + $0x2c8] sm:$0xff]
    %v326 = vld [vmem:[#allocation2 + $0x2d0] sm:$0xff]
    %v327 = vld [vmem:[#allocation2 + $0x2d8] sm:$0xff]
    %v328 = vld [vmem:[#allocation2 + $0x2e0] sm:$0xff]
    %v329 = vld [vmem:[#allocation2 + $0x2e8] sm:$0xff]
    %v330 = vld [vmem:[#allocation2 + $0x2f0] sm:$0xff]
    %v331 = vld [vmem:[#allocation2 + $0x2f8] sm:$0xff]
    %v332 = vld [vmem:[#allocation2 + $0x300] sm:$0xff]
    %v333 = vld [vmem:[#allocation2 + $0x308] sm:$0xff]
    %v334 = vld [vmem:[#allocation2 + $0x310] sm:$0xff]
    %v335 = vld [vmem:[#allocation2 + $0x318] sm:$0xff]
    %v336 = vld [vmem:[#allocation2 + $0x320] sm:$0xff]
    %v337 = vld [vmem:[#allocation2 + $0x328] sm:$0xff]
    %v338 = vld [vmem:[#allocation2 + $0x330] sm:$0xff]
    %v339 = vld [vmem:[#allocation2 + $0x338] sm:$0xff]
    %v340 = vld [vmem:[#allocation2 + $0x340] sm:$0xff]
    %v341 = vld [vmem:[#allocation2 + $0x348] sm:$0xff]
    %v342 = vld [vmem:[#allocation2 + $0x350] sm:$0xff]
    %v343 = vld [vmem:[#allocation2 + $0x358] sm:$0xff]
    %v344 = vld [vmem:[#allocation2 + $0x360] sm:$0xff]
    %v345 = vld [vmem:[#allocation2 + $0x368] sm:$0xff]
    %v346 = vld [vmem:[#allocation2 + $0x370] sm:$0xff]
    %v347 = vld [vmem:[#allocation2 + $0x378] sm:$0xff]
    %v348 = vld [vmem:[#allocation2 + $0x380] sm:$0xff]
    %v349 = vld [vmem:[#allocation2 + $0x388] sm:$0xff]
    %v350 = vld [vmem:[#allocation2 + $0x390] sm:$0xff]
    %v351 = vld [vmem:[#allocation2 + $0x398] sm:$0xff]
    %v352 = vld [vmem:[#allocation2 + $0x3a0] sm:$0xff]
    %v353 = vld [vmem:[#allocation2 + $0x3a8] sm:$0xff]
    %v354 = vld [vmem:[#allocation2 + $0x3b0] sm:$0xff]
    %v355 = vld [vmem:[#allocation2 + $0x3b8] sm:$0xff]
    %v356 = vld [vmem:[#allocation2 + $0x3c0] sm:$0xff]
    %v357 = vld [vmem:[#allocation2 + $0x3c8] sm:$0xff]
    %v358 = vld [vmem:[#allocation2 + $0x3d0] sm:$0xff]
    %v359 = vld [vmem:[#allocation2 + $0x3d8] sm:$0xff]
    %v360 = vld [vmem:[#allocation2 + $0x3e0] sm:$0xff]
    %v361 = vld [vmem:[#allocation2 + $0x3e8] sm:$0xff]
    %v362 = vld [vmem:[#allocation2 + $0x3f0] sm:$0xff]
    %v363 = vld [vmem:[#allocation2 + $0x3f8] sm:$0xff]
    %v364 = vld [vmem:[%s4] sm:$0xf]
    %v366 = vlaneseq
    %v367 = vshrl.u32 %v366, 7
    %v368 = vsub.s32 0, %v367
    %v369 = vrot.slane %v364, %v368
    %v370 = vlaneseq
    %v371 = vshrl.u32 %v370, 7
    %v372 = vsub.s32 1, %v371
    %v373 = vrot.slane %v364, %v372
    %v374 = vlaneseq
    %v375 = vshrl.u32 %v374, 7
    %v376 = vsub.s32 2, %v375
    %v377 = vrot.slane %v364, %v376
    %v378 = vlaneseq
    %v379 = vshrl.u32 %v378, 7
    %v380 = vsub.s32 3, %v379
    %v381 = vrot.slane %v364, %v380
    %v514 = vunpack.c.l.b16 %v236
    %v515 = vunpack.c.h.b16 %v236
    %v516 = vunpack.c.l.b16 %v237
    %v517 = vunpack.c.h.b16 %v237
    %v518 = vunpack.c.l.b16 %v238
    %v519 = vunpack.c.h.b16 %v238
    %v520 = vunpack.c.l.b16 %v239
    %v521 = vunpack.c.h.b16 %v239
    %v522 = vunpack.c.l.b16 %v240
    %v523 = vunpack.c.h.b16 %v240
    %v524 = vunpack.c.l.b16 %v241
    %v525 = vunpack.c.h.b16 %v241
    %v526 = vunpack.c.l.b16 %v242
    %v527 = vunpack.c.h.b16 %v242
    %v528 = vunpack.c.l.b16 %v243
    %v529 = vunpack.c.h.b16 %v243
    %v530 = vunpack.c.l.b16 %v244
    %v531 = vunpack.c.h.b16 %v244
    %v532 = vunpack.c.l.b16 %v245
    %v533 = vunpack.c.h.b16 %v245
    %v534 = vunpack.c.l.b16 %v246
    %v535 = vunpack.c.h.b16 %v246
    %v536 = vunpack.c.l.b16 %v247
    %v537 = vunpack.c.h.b16 %v247
    %v538 = vunpack.c.l.b16 %v248
    %v539 = vunpack.c.h.b16 %v248
    %v540 = vunpack.c.l.b16 %v249
    %v541 = vunpack.c.h.b16 %v249
    %v542 = vunpack.c.l.b16 %v250
    %v543 = vunpack.c.h.b16 %v250
    %v544 = vunpack.c.l.b16 %v251
    %v545 = vunpack.c.h.b16 %v251
    %v546 = vunpack.c.l.b16 %v252
    %v547 = vunpack.c.h.b16 %v252
    %v548 = vunpack.c.l.b16 %v253
    %v549 = vunpack.c.h.b16 %v253
    %v550 = vunpack.c.l.b16 %v254
    %v551 = vunpack.c.h.b16 %v254
    %v552 = vunpack.c.l.b16 %v255
    %v553 = vunpack.c.h.b16 %v255
    %v554 = vunpack.c.l.b16 %v256
    %v555 = vunpack.c.h.b16 %v256
    %v556 = vunpack.c.l.b16 %v257
    %v557 = vunpack.c.h.b16 %v257
    %v558 = vunpack.c.l.b16 %v258
    %v559 = vunpack.c.h.b16 %v258
    %v560 = vunpack.c.l.b16 %v259
    %v561 = vunpack.c.h.b16 %v259
    %v562 = vunpack.c.l.b16 %v260
    %v563 = vunpack.c.h.b16 %v260
    %v564 = vunpack.c.l.b16 %v261
    %v565 = vunpack.c.h.b16 %v261
    %v566 = vunpack.c.l.b16 %v262
    %v567 = vunpack.c.h.b16 %v262
    %v568 = vunpack.c.l.b16 %v263
    %v569 = vunpack.c.h.b16 %v263
    %v570 = vunpack.c.l.b16 %v264
    %v571 = vunpack.c.h.b16 %v264
    %v572 = vunpack.c.l.b16 %v265
    %v573 = vunpack.c.h.b16 %v265
    %v574 = vunpack.c.l.b16 %v266
    %v575 = vunpack.c.h.b16 %v266
    %v576 = vunpack.c.l.b16 %v267
    %v577 = vunpack.c.h.b16 %v267
    %v578 = vunpack.c.l.b16 %v268
    %v579 = vunpack.c.h.b16 %v268
    %v580 = vunpack.c.l.b16 %v269
    %v581 = vunpack.c.h.b16 %v269
    %v582 = vunpack.c.l.b16 %v270
    %v583 = vunpack.c.h.b16 %v270
    %v584 = vunpack.c.l.b16 %v271
    %v585 = vunpack.c.h.b16 %v271
    %v586 = vunpack.c.l.b16 %v272
    %v587 = vunpack.c.h.b16 %v272
    %v588 = vunpack.c.l.b16 %v273
    %v589 = vunpack.c.h.b16 %v273
    %v590 = vunpack.c.l.b16 %v274
    %v591 = vunpack.c.h.b16 %v274
    %v592 = vunpack.c.l.b16 %v275
    %v593 = vunpack.c.h.b16 %v275
    %v594 = vunpack.c.l.b16 %v276
    %v595 = vunpack.c.h.b16 %v276
    %v596 = vunpack.c.l.b16 %v277
    %v597 = vunpack.c.h.b16 %v277
    %v598 = vunpack.c.l.b16 %v278
    %v599 = vunpack.c.h.b16 %v278
    %v600 = vunpack.c.l.b16 %v279
    %v601 = vunpack.c.h.b16 %v279
    %v602 = vunpack.c.l.b16 %v280
    %v603 = vunpack.c.h.b16 %v280
    %v604 = vunpack.c.l.b16 %v281
    %v605 = vunpack.c.h.b16 %v281
    %v606 = vunpack.c.l.b16 %v282
    %v607 = vunpack.c.h.b16 %v282
    %v608 = vunpack.c.l.b16 %v283
    %v609 = vunpack.c.h.b16 %v283
    %v610 = vunpack.c.l.b16 %v284
    %v611 = vunpack.c.h.b16 %v284
    %v612 = vunpack.c.l.b16 %v285
    %v613 = vunpack.c.h.b16 %v285
    %v614 = vunpack.c.l.b16 %v286
    %v615 = vunpack.c.h.b16 %v286
    %v616 = vunpack.c.l.b16 %v287
    %v617 = vunpack.c.h.b16 %v287
    %v618 = vunpack.c.l.b16 %v288
    %v619 = vunpack.c.h.b16 %v288
    %v620 = vunpack.c.l.b16 %v289
    %v621 = vunpack.c.h.b16 %v289
    %v622 = vunpack.c.l.b16 %v290
    %v623 = vunpack.c.h.b16 %v290
    %v624 = vunpack.c.l.b16 %v291
    %v625 = vunpack.c.h.b16 %v291
    %v626 = vunpack.c.l.b16 %v292
    %v627 = vunpack.c.h.b16 %v292
    %v628 = vunpack.c.l.b16 %v293
    %v629 = vunpack.c.h.b16 %v293
    %v630 = vunpack.c.l.b16 %v294
    %v631 = vunpack.c.h.b16 %v294
    %v632 = vunpack.c.l.b16 %v295
    %v633 = vunpack.c.h.b16 %v295
    %v634 = vunpack.c.l.b16 %v296
    %v635 = vunpack.c.h.b16 %v296
    %v636 = vunpack.c.l.b16 %v297
    %v637 = vunpack.c.h.b16 %v297
    %v638 = vunpack.c.l.b16 %v298
    %v639 = vunpack.c.h.b16 %v298
    %v640 = vunpack.c.l.b16 %v299
    %v641 = vunpack.c.h.b16 %v299
    %v642 = vunpack.c.l.b16 %v300
    %v643 = vunpack.c.h.b16 %v300
    %v644 = vunpack.c.l.b16 %v301
    %v645 = vunpack.c.h.b16 %v301
    %v646 = vunpack.c.l.b16 %v302
    %v647 = vunpack.c.h.b16 %v302
    %v648 = vunpack.c.l.b16 %v303
    %v649 = vunpack.c.h.b16 %v303
    %v650 = vunpack.c.l.b16 %v304
    %v651 = vunpack.c.h.b16 %v304
    %v652 = vunpack.c.l.b16 %v305
    %v653 = vunpack.c.h.b16 %v305
    %v654 = vunpack.c.l.b16 %v306
    %v655 = vunpack.c.h.b16 %v306
    %v656 = vunpack.c.l.b16 %v307
    %v657 = vunpack.c.h.b16 %v307
    %v658 = vunpack.c.l.b16 %v308
    %v659 = vunpack.c.h.b16 %v308
    %v660 = vunpack.c.l.b16 %v309
    %v661 = vunpack.c.h.b16 %v309
    %v662 = vunpack.c.l.b16 %v310
    %v663 = vunpack.c.h.b16 %v310
    %v664 = vunpack.c.l.b16 %v311
    %v665 = vunpack.c.h.b16 %v311
    %v666 = vunpack.c.l.b16 %v312
    %v667 = vunpack.c.h.b16 %v312
    %v668 = vunpack.c.l.b16 %v313
    %v669 = vunpack.c.h.b16 %v313
    %v670 = vunpack.c.l.b16 %v314
    %v671 = vunpack.c.h.b16 %v314
    %v672 = vunpack.c.l.b16 %v315
    %v673 = vunpack.c.h.b16 %v315
    %v674 = vunpack.c.l.b16 %v316
    %v675 = vunpack.c.h.b16 %v316
    %v676 = vunpack.c.l.b16 %v317
    %v677 = vunpack.c.h.b16 %v317
    %v678 = vunpack.c.l.b16 %v318
    %v679 = vunpack.c.h.b16 %v318
    %v680 = vunpack.c.l.b16 %v319
    %v681 = vunpack.c.h.b16 %v319
    %v682 = vunpack.c.l.b16 %v320
    %v683 = vunpack.c.h.b16 %v320
    %v684 = vunpack.c.l.b16 %v321
    %v685 = vunpack.c.h.b16 %v321
    %v686 = vunpack.c.l.b16 %v322
    %v687 = vunpack.c.h.b16 %v322
    %v688 = vunpack.c.l.b16 %v323
    %v689 = vunpack.c.h.b16 %v323
    %v690 = vunpack.c.l.b16 %v324
    %v691 = vunpack.c.h.b16 %v324
    %v692 = vunpack.c.l.b16 %v325
    %v693 = vunpack.c.h.b16 %v325
    %v694 = vunpack.c.l.b16 %v326
    %v695 = vunpack.c.h.b16 %v326
    %v696 = vunpack.c.l.b16 %v327
    %v697 = vunpack.c.h.b16 %v327
    %v698 = vunpack.c.l.b16 %v328
    %v699 = vunpack.c.h.b16 %v328
    %v700 = vunpack.c.l.b16 %v329
    %v701 = vunpack.c.h.b16 %v329
    %v702 = vunpack.c.l.b16 %v330
    %v703 = vunpack.c.h.b16 %v330
    %v704 = vunpack.c.l.b16 %v331
    %v705 = vunpack.c.h.b16 %v331
    %v706 = vunpack.c.l.b16 %v332
    %v707 = vunpack.c.h.b16 %v332
    %v708 = vunpack.c.l.b16 %v333
    %v709 = vunpack.c.h.b16 %v333
    %v710 = vunpack.c.l.b16 %v334
    %v711 = vunpack.c.h.b16 %v334
    %v712 = vunpack.c.l.b16 %v335
    %v713 = vunpack.c.h.b16 %v335
    %v714 = vunpack.c.l.b16 %v336
    %v715 = vunpack.c.h.b16 %v336
    %v716 = vunpack.c.l.b16 %v337
    %v717 = vunpack.c.h.b16 %v337
    %v718 = vunpack.c.l.b16 %v338
    %v719 = vunpack.c.h.b16 %v338
    %v720 = vunpack.c.l.b16 %v339
    %v721 = vunpack.c.h.b16 %v339
    %v722 = vunpack.c.l.b16 %v340
    %v723 = vunpack.c.h.b16 %v340
    %v724 = vunpack.c.l.b16 %v341
    %v725 = vunpack.c.h.b16 %v341
    %v726 = vunpack.c.l.b16 %v342
    %v727 = vunpack.c.h.b16 %v342
    %v728 = vunpack.c.l.b16 %v343
    %v729 = vunpack.c.h.b16 %v343
    %v730 = vunpack.c.l.b16 %v344
    %v731 = vunpack.c.h.b16 %v344
    %v732 = vunpack.c.l.b16 %v345
    %v733 = vunpack.c.h.b16 %v345
    %v734 = vunpack.c.l.b16 %v346
    %v735 = vunpack.c.h.b16 %v346
    %v736 = vunpack.c.l.b16 %v347
    %v737 = vunpack.c.h.b16 %v347
    %v738 = vunpack.c.l.b16 %v348
    %v739 = vunpack.c.h.b16 %v348
    %v740 = vunpack.c.l.b16 %v349
    %v741 = vunpack.c.h.b16 %v349
    %v742 = vunpack.c.l.b16 %v350
    %v743 = vunpack.c.h.b16 %v350
    %v744 = vunpack.c.l.b16 %v351
    %v745 = vunpack.c.h.b16 %v351
    %v746 = vunpack.c.l.b16 %v352
    %v747 = vunpack.c.h.b16 %v352
    %v748 = vunpack.c.l.b16 %v353
    %v749 = vunpack.c.h.b16 %v353
    %v750 = vunpack.c.l.b16 %v354
    %v751 = vunpack.c.h.b16 %v354
    %v752 = vunpack.c.l.b16 %v355
    %v753 = vunpack.c.h.b16 %v355
    %v754 = vunpack.c.l.b16 %v356
    %v755 = vunpack.c.h.b16 %v356
    %v756 = vunpack.c.l.b16 %v357
    %v757 = vunpack.c.h.b16 %v357
    %v758 = vunpack.c.l.b16 %v358
    %v759 = vunpack.c.h.b16 %v358
    %v760 = vunpack.c.l.b16 %v359
    %v761 = vunpack.c.h.b16 %v359
    %v762 = vunpack.c.l.b16 %v360
    %v763 = vunpack.c.h.b16 %v360
    %v764 = vunpack.c.l.b16 %v361
    %v765 = vunpack.c.h.b16 %v361
    %v766 = vunpack.c.l.b16 %v362
    %v767 = vunpack.c.h.b16 %v362
    %v768 = vunpack.c.l.b16 %v363
    %v769 = vunpack.c.h.b16 %v363
    %v770 = vpack.c.b16 %v518, %v514
    %v771 = vpack.c.b16 %v519, %v515
    %v772 = vpack.c.b16 %v520, %v516
    %v773 = vpack.c.b16 %v521, %v517
    %v774 = vpack.c.b16 %v526, %v522
    %v775 = vpack.c.b16 %v527, %v523
    %v776 = vpack.c.b16 %v528, %v524
    %v777 = vpack.c.b16 %v529, %v525
    %v778 = vpack.c.b16 %v534, %v530
    %v779 = vpack.c.b16 %v535, %v531
    %v780 = vpack.c.b16 %v536, %v532
    %v781 = vpack.c.b16 %v537, %v533
    %v782 = vpack.c.b16 %v542, %v538
    %v783 = vpack.c.b16 %v543, %v539
    %v784 = vpack.c.b16 %v544, %v540
    %v785 = vpack.c.b16 %v545, %v541
    %v786 = vpack.c.b16 %v550, %v546
    %v787 = vpack.c.b16 %v551, %v547
    %v788 = vpack.c.b16 %v552, %v548
    %v789 = vpack.c.b16 %v553, %v549
    %v790 = vpack.c.b16 %v558, %v554
    %v791 = vpack.c.b16 %v559, %v555
    %v792 = vpack.c.b16 %v560, %v556
    %v793 = vpack.c.b16 %v561, %v557
    %v794 = vpack.c.b16 %v566, %v562
    %v795 = vpack.c.b16 %v567, %v563
    %v796 = vpack.c.b16 %v568, %v564
    %v797 = vpack.c.b16 %v569, %v565
    %v798 = vpack.c.b16 %v574, %v570
    %v799 = vpack.c.b16 %v575, %v571
    %v800 = vpack.c.b16 %v576, %v572
    %v801 = vpack.c.b16 %v577, %v573
    %v802 = vpack.c.b16 %v582, %v578
    %v803 = vpack.c.b16 %v583, %v579
    %v804 = vpack.c.b16 %v584, %v580
    %v805 = vpack.c.b16 %v585, %v581
    %v806 = vpack.c.b16 %v590, %v586
    %v807 = vpack.c.b16 %v591, %v587
    %v808 = vpack.c.b16 %v592, %v588
    %v809 = vpack.c.b16 %v593, %v589
    %v810 = vpack.c.b16 %v598, %v594
    %v811 = vpack.c.b16 %v599, %v595
    %v812 = vpack.c.b16 %v600, %v596
    %v813 = vpack.c.b16 %v601, %v597
    %v814 = vpack.c.b16 %v606, %v602
    %v815 = vpack.c.b16 %v607, %v603
    %v816 = vpack.c.b16 %v608, %v604
    %v817 = vpack.c.b16 %v609, %v605
    %v818 = vpack.c.b16 %v614, %v610
    %v819 = vpack.c.b16 %v615, %v611
    %v820 = vpack.c.b16 %v616, %v612
    %v821 = vpack.c.b16 %v617, %v613
    %v822 = vpack.c.b16 %v622, %v618
    %v823 = vpack.c.b16 %v623, %v619
    %v824 = vpack.c.b16 %v624, %v620
    %v825 = vpack.c.b16 %v625, %v621
    %v826 = vpack.c.b16 %v630, %v626
    %v827 = vpack.c.b16 %v631, %v627
    %v828 = vpack.c.b16 %v632, %v628
    %v829 = vpack.c.b16 %v633, %v629
    %v830 = vpack.c.b16 %v638, %v634
    %v831 = vpack.c.b16 %v639, %v635
    %v832 = vpack.c.b16 %v640, %v636
    %v833 = vpack.c.b16 %v641, %v637
    %v834 = vpack.c.b16 %v646, %v642
    %v835 = vpack.c.b16 %v647, %v643
    %v836 = vpack.c.b16 %v648, %v644
    %v837 = vpack.c.b16 %v649, %v645
    %v838 = vpack.c.b16 %v654, %v650
    %v839 = vpack.c.b16 %v655, %v651
    %v840 = vpack.c.b16 %v656, %v652
    %v841 = vpack.c.b16 %v657, %v653
    %v842 = vpack.c.b16 %v662, %v658
    %v843 = vpack.c.b16 %v663, %v659
    %v844 = vpack.c.b16 %v664, %v660
    %v845 = vpack.c.b16 %v665, %v661
    %v846 = vpack.c.b16 %v670, %v666
    %v847 = vpack.c.b16 %v671, %v667
    %v848 = vpack.c.b16 %v672, %v668
    %v849 = vpack.c.b16 %v673, %v669
    %v850 = vpack.c.b16 %v678, %v674
    %v851 = vpack.c.b16 %v679, %v675
    %v852 = vpack.c.b16 %v680, %v676
    %v853 = vpack.c.b16 %v681, %v677
    %v854 = vpack.c.b16 %v686, %v682
    %v855 = vpack.c.b16 %v687, %v683
    %v856 = vpack.c.b16 %v688, %v684
    %v857 = vpack.c.b16 %v689, %v685
    %v858 = vpack.c.b16 %v694, %v690
    %v859 = vpack.c.b16 %v695, %v691
    %v860 = vpack.c.b16 %v696, %v692
    %v861 = vpack.c.b16 %v697, %v693
    %v862 = vpack.c.b16 %v702, %v698
    %v863 = vpack.c.b16 %v703, %v699
    %v864 = vpack.c.b16 %v704, %v700
    %v865 = vpack.c.b16 %v705, %v701
    %v866 = vpack.c.b16 %v710, %v706
    %v867 = vpack.c.b16 %v711, %v707
    %v868 = vpack.c.b16 %v712, %v708
    %v869 = vpack.c.b16 %v713, %v709
    %v870 = vpack.c.b16 %v718, %v714
    %v871 = vpack.c.b16 %v719, %v715
    %v872 = vpack.c.b16 %v720, %v716
    %v873 = vpack.c.b16 %v721, %v717
    %v874 = vpack.c.b16 %v726, %v722
    %v875 = vpack.c.b16 %v727, %v723
    %v876 = vpack.c.b16 %v728, %v724
    %v877 = vpack.c.b16 %v729, %v725
    %v878 = vpack.c.b16 %v734, %v730
    %v879 = vpack.c.b16 %v735, %v731
    %v880 = vpack.c.b16 %v736, %v732
    %v881 = vpack.c.b16 %v737, %v733
    %v882 = vpack.c.b16 %v742, %v738
    %v883 = vpack.c.b16 %v743, %v739
    %v884 = vpack.c.b16 %v744, %v740
    %v885 = vpack.c.b16 %v745, %v741
    %v886 = vpack.c.b16 %v750, %v746
    %v887 = vpack.c.b16 %v751, %v747
    %v888 = vpack.c.b16 %v752, %v748
    %v889 = vpack.c.b16 %v753, %v749
    %v890 = vpack.c.b16 %v758, %v754
    %v891 = vpack.c.b16 %v759, %v755
    %v892 = vpack.c.b16 %v760, %v756
    %v893 = vpack.c.b16 %v761, %v757
    %v894 = vpack.c.b16 %v766, %v762
    %v895 = vpack.c.b16 %v767, %v763
    %v896 = vpack.c.b16 %v768, %v764
    %v897 = vpack.c.b16 %v769, %v765
    %1026 = vmatprep.subr.bf16.mxu0 %v771
    %1027 = vmatpush1.bf16.msra.mxu0 %v770
    %1028 = vmatprep.subr.bf16.mxu0 %v775
    %1029 = vmatpush1.bf16.msra.mxu0 %v774
    %1030 = vmatprep.subr.bf16.mxu0 %v779
    %1031 = vmatpush1.bf16.msra.mxu0 %v778
    %1032 = vmatprep.subr.bf16.mxu0 %v783
    %1033 = vmatpush1.bf16.msra.mxu0 %v782
    %1034 = vmatprep.subr.bf16.mxu0 %v787
    %1035 = vmatpush1.bf16.msra.mxu0 %v786
    %1036 = vmatprep.subr.bf16.mxu0 %v791
    %1037 = vmatpush1.bf16.msra.mxu0 %v790
    %1038 = vmatprep.subr.bf16.mxu0 %v795
    %1039 = vmatpush1.bf16.msra.mxu0 %v794
    %1040 = vmatprep.subr.bf16.mxu0 %v799
    %1041 = vmatpush1.bf16.msra.mxu0 %v798
    %1042 = vmatprep.subr.bf16.mxu0 %v803
    %1043 = vmatpush1.bf16.msra.mxu0 %v802
    %1044 = vmatprep.subr.bf16.mxu0 %v807
    %1045 = vmatpush1.bf16.msra.mxu0 %v806
    %1046 = vmatprep.subr.bf16.mxu0 %v811
    %1047 = vmatpush1.bf16.msra.mxu0 %v810
    %1048 = vmatprep.subr.bf16.mxu0 %v815
    %1049 = vmatpush1.bf16.msra.mxu0 %v814
    %1050 = vmatprep.subr.bf16.mxu0 %v819
    %1051 = vmatpush1.bf16.msra.mxu0 %v818
    %1052 = vmatprep.subr.bf16.mxu0 %v823
    %1053 = vmatpush1.bf16.msra.mxu0 %v822
    %1054 = vmatprep.subr.bf16.mxu0 %v827
    %1055 = vmatpush1.bf16.msra.mxu0 %v826
    %1056 = vmatprep.subr.bf16.mxu0 %v831
    %1057 = vmatpush1.bf16.msra.mxu0 %v830
    %1058 = vmatprep.mubr.bf16.mxu0 %v233
    %1059 = vmatmul.mubr.bf16.gmra.mrb[0].mxu0 %v232
    %v1060 = vpop.f32.mrb[0].mxu0
    %v1061 = vadd.f32 %v369, %v1060
    %v1062 = vpop.f32.mrb[0].mxu0
    %v1063 = vadd.f32 %v373, %v1062
    %v1064 = vpop.f32.mrb[0].mxu0
    %v1065 = vpop.f32.mrb[0].mxu0
    %1066 = vdwg.mxu0
    %1067 = vmatprep.subr.bf16.mxu0 %v835
    %1068 = vmatpush1.bf16.msra.mxu0 %v834
    %1069 = vmatprep.subr.bf16.mxu0 %v839
    %1070 = vmatpush1.bf16.msra.mxu0 %v838
    %1071 = vmatprep.subr.bf16.mxu0 %v843
    %1072 = vmatpush1.bf16.msra.mxu0 %v842
    %1073 = vmatprep.subr.bf16.mxu0 %v847
    %1074 = vmatpush1.bf16.msra.mxu0 %v846
    %1075 = vmatprep.subr.bf16.mxu0 %v851
    %1076 = vmatpush1.bf16.msra.mxu0 %v850
    %1077 = vmatprep.subr.bf16.mxu0 %v855
    %1078 = vmatpush1.bf16.msra.mxu0 %v854
    %1079 = vmatprep.subr.bf16.mxu0 %v859
    %1080 = vmatpush1.bf16.msra.mxu0 %v858
    %1081 = vmatprep.subr.bf16.mxu0 %v863
    %1082 = vmatpush1.bf16.msra.mxu0 %v862
    %1083 = vmatprep.subr.bf16.mxu0 %v867
    %1084 = vmatpush1.bf16.msra.mxu0 %v866
    %1085 = vmatprep.subr.bf16.mxu0 %v871
    %1086 = vmatpush1.bf16.msra.mxu0 %v870
    %1087 = vmatprep.subr.bf16.mxu0 %v875
    %1088 = vmatpush1.bf16.msra.mxu0 %v874
    %1089 = vmatprep.subr.bf16.mxu0 %v879
    %1090 = vmatpush1.bf16.msra.mxu0 %v878
    %1091 = vmatprep.subr.bf16.mxu0 %v883
    %1092 = vmatpush1.bf16.msra.mxu0 %v882
    %1093 = vmatprep.subr.bf16.mxu0 %v887
    %1094 = vmatpush1.bf16.msra.mxu0 %v886
    %1095 = vmatprep.subr.bf16.mxu0 %v891
    %1096 = vmatpush1.bf16.msra.mxu0 %v890
    %1097 = vmatprep.subr.bf16.mxu0 %v895
    %1098 = vmatpush1.bf16.msra.mxu0 %v894
    %1099 = vmatprep.mubr.bf16.mxu0 %v235
    %1100 = vmatmul.mubr.bf16.gmra.mrb[0].mxu0 %v234
    %v1101 = vpop.f32.mrb[0].mxu0
    %v1102 = vadd.f32 %v1061, %v1101
    %v1103 = vpop.f32.mrb[0].mxu0
    %v1104 = vadd.f32 %v1063, %v1103
    %v1105 = vpop.f32.mrb[0].mxu0
    %v1106 = vpop.f32.mrb[0].mxu0
    %1107 = vdwg.mxu0
    %1108 = vmatprep.subr.bf16.mxu0 %v773
    %1109 = vmatpush1.bf16.msra.mxu0 %v772
    %1110 = vmatprep.subr.bf16.mxu0 %v777
    %1111 = vmatpush1.bf16.msra.mxu0 %v776
    %1112 = vmatprep.subr.bf16.mxu0 %v781
    %1113 = vmatpush1.bf16.msra.mxu0 %v780
    %1114 = vmatprep.subr.bf16.mxu0 %v785
    %1115 = vmatpush1.bf16.msra.mxu0 %v784
    %1116 = vmatprep.subr.bf16.mxu0 %v789
    %1117 = vmatpush1.bf16.msra.mxu0 %v788
    %1118 = vmatprep.subr.bf16.mxu0 %v793
    %1119 = vmatpush1.bf16.msra.mxu0 %v792
    %1120 = vmatprep.subr.bf16.mxu0 %v797
    %1121 = vmatpush1.bf16.msra.mxu0 %v796
    %1122 = vmatprep.subr.bf16.mxu0 %v801
    %1123 = vmatpush1.bf16.msra.mxu0 %v800
    %1124 = vmatprep.subr.bf16.mxu0 %v805
    %1125 = vmatpush1.bf16.msra.mxu0 %v804
    %1126 = vmatprep.subr.bf16.mxu0 %v809
    %1127 = vmatpush1.bf16.msra.mxu0 %v808
    %1128 = vmatprep.subr.bf16.mxu0 %v813
    %1129 = vmatpush1.bf16.msra.mxu0 %v812
    %1130 = vmatprep.subr.bf16.mxu0 %v817
    %1131 = vmatpush1.bf16.msra.mxu0 %v816
    %1132 = vmatprep.subr.bf16.mxu0 %v821
    %1133 = vmatpush1.bf16.msra.mxu0 %v820
    %1134 = vmatprep.subr.bf16.mxu0 %v825
    %1135 = vmatpush1.bf16.msra.mxu0 %v824
    %1136 = vmatprep.subr.bf16.mxu0 %v829
    %1137 = vmatpush1.bf16.msra.mxu0 %v828
    %1138 = vmatprep.subr.bf16.mxu0 %v833
    %1139 = vmatpush1.bf16.msra.mxu0 %v832
    %1140 = vmatprep.mubr.bf16.mxu0 %v233
    %1141 = vmatmul.mubr.bf16.gmra.mrb[0].mxu0 %v232
    %v1142 = vpop.f32.mrb[0].mxu0
    %v1143 = vadd.f32 %v377, %v1142
    %v1144 = vpop.f32.mrb[0].mxu0
    %v1145 = vadd.f32 %v381, %v1144
    %v1146 = vpop.f32.mrb[0].mxu0
    %v1147 = vpop.f32.mrb[0].mxu0
    %1148 = vdwg.mxu0
    %1149 = vmatprep.subr.bf16.mxu0 %v837
    %1150 = vmatpush1.bf16.msra.mxu0 %v836
    %1151 = vmatprep.subr.bf16.mxu0 %v841
    %1152 = vmatpush1.bf16.msra.mxu0 %v840
    %1153 = vmatprep.subr.bf16.mxu0 %v845
    %1154 = vmatpush1.bf16.msra.mxu0 %v844
    %1155 = vmatprep.subr.bf16.mxu0 %v849
    %1156 = vmatpush1.bf16.msra.mxu0 %v848
    %1157 = vmatprep.subr.bf16.mxu0 %v853
    %1158 = vmatpush1.bf16.msra.mxu0 %v852
    %1159 = vmatprep.subr.bf16.mxu0 %v857
    %1160 = vmatpush1.bf16.msra.mxu0 %v856
    %1161 = vmatprep.subr.bf16.mxu0 %v861
    %1162 = vmatpush1.bf16.msra.mxu0 %v860
    %1163 = vmatprep.subr.bf16.mxu0 %v865
    %1164 = vmatpush1.bf16.msra.mxu0 %v864
    %1165 = vmatprep.subr.bf16.mxu0 %v869
    %1166 = vmatpush1.bf16.msra.mxu0 %v868
    %1167 = vmatprep.subr.bf16.mxu0 %v873
    %1168 = vmatpush1.bf16.msra.mxu0 %v872
    %1169 = vmatprep.subr.bf16.mxu0 %v877
    %1170 = vmatpush1.bf16.msra.mxu0 %v876
    %1171 = vmatprep.subr.bf16.mxu0 %v881
    %1172 = vmatpush1.bf16.msra.mxu0 %v880
    %1173 = vmatprep.subr.bf16.mxu0 %v885
    %1174 = vmatpush1.bf16.msra.mxu0 %v884
    %1175 = vmatprep.subr.bf16.mxu0 %v889
    %1176 = vmatpush1.bf16.msra.mxu0 %v888
    %1177 = vmatprep.subr.bf16.mxu0 %v893
    %1178 = vmatpush1.bf16.msra.mxu0 %v892
    %1179 = vmatprep.subr.bf16.mxu0 %v897
    %1180 = vmatpush1.bf16.msra.mxu0 %v896
    %1181 = vmatprep.mubr.bf16.mxu0 %v235
    %1182 = vmatmul.mubr.bf16.gmra.mrb[0].mxu0 %v234
    %v1183 = vpop.f32.mrb[0].mxu0
    %v1184 = vadd.f32 %v1143, %v1183
    %v1185 = vpop.f32.mrb[0].mxu0
    %v1186 = vadd.f32 %v1145, %v1185
    %v1187 = vpop.f32.mrb[0].mxu0
    %v1188 = vpop.f32.mrb[0].mxu0
    %1189 = vdwg.mxu0
    %v1190 = vmax.f32 %v1102, 0.0
    %v1191 = vmax.f32 %v1104, 0.0
    %v1192 = vmax.f32 %v1184, 0.0
    %v1193 = vmax.f32 %v1186, 0.0
    %v1194 = vpack.c.bf16 %v1190, %v1190
    %v1195 = vpack.c.bf16 %v1191, %v1191
    %v1196 = vpack.c.bf16 %v1192, %v1192
    %v1197 = vpack.c.bf16 %v1193, %v1193
    %v1198 = vld [vmem:[%s5] sm:$0xf]
    %v1199 = vld [vmem:[%s5 + $0x4] sm:$0xf]
    %v1200 = vld [vmem:[%s5 + $0x8] sm:$0xf]
    %v1201 = vld [vmem:[%s5 + $0xc] sm:$0xf]
    %v1202 = vld [vmem:[%s5 + $0x10] sm:$0xf]
    %v1203 = vld [vmem:[%s5 + $0x14] sm:$0xf]
    %v1204 = vld [vmem:[%s5 + $0x18] sm:$0xf]
    %v1205 = vld [vmem:[%s5 + $0x1c] sm:$0xf]
    %v1206 = vld [vmem:[%s5 + $0x20] sm:$0xf]
    %v1207 = vld [vmem:[%s5 + $0x24] sm:$0xf]
    %v1208 = vld [vmem:[%s5 + $0x28] sm:$0xf]
    %v1209 = vld [vmem:[%s5 + $0x2c] sm:$0xf]
    %v1210 = vld [vmem:[%s5 + $0x30] sm:$0xf]
    %v1211 = vld [vmem:[%s5 + $0x34] sm:$0xf]
    %v1212 = vld [vmem:[%s5 + $0x38] sm:$0xf]
    %v1213 = vld [vmem:[%s5 + $0x3c] sm:$0xf]
    %v1214 = vld [vmem:[%s5 + $0x40] sm:$0xf]
    %v1215 = vld [vmem:[%s5 + $0x44] sm:$0xf]
    %v1216 = vld [vmem:[%s5 + $0x48] sm:$0xf]
    %v1217 = vld [vmem:[%s5 + $0x4c] sm:$0xf]
    %v1218 = vld [vmem:[%s5 + $0x50] sm:$0xf]
    %v1219 = vld [vmem:[%s5 + $0x54] sm:$0xf]
    %v1220 = vld [vmem:[%s5 + $0x58] sm:$0xf]
    %v1221 = vld [vmem:[%s5 + $0x5c] sm:$0xf]
    %v1222 = vld [vmem:[%s5 + $0x60] sm:$0xf]
    %v1223 = vld [vmem:[%s5 + $0x64] sm:$0xf]
    %v1224 = vld [vmem:[%s5 + $0x68] sm:$0xf]
    %v1225 = vld [vmem:[%s5 + $0x6c] sm:$0xf]
    %v1226 = vld [vmem:[%s5 + $0x70] sm:$0xf]
    %v1227 = vld [vmem:[%s5 + $0x74] sm:$0xf]
    %v1228 = vld [vmem:[%s5 + $0x78] sm:$0xf]
    %v1229 = vld [vmem:[%s5 + $0x7c] sm:$0xf]
    %v1230 = vld [vmem:[%s5 + $0x80] sm:$0xf]
    %v1231 = vld [vmem:[%s5 + $0x84] sm:$0xf]
    %v1232 = vld [vmem:[%s5 + $0x88] sm:$0xf]
    %v1233 = vld [vmem:[%s5 + $0x8c] sm:$0xf]
    %v1234 = vld [vmem:[%s5 + $0x90] sm:$0xf]
    %v1235 = vld [vmem:[%s5 + $0x94] sm:$0xf]
    %v1236 = vld [vmem:[%s5 + $0x98] sm:$0xf]
    %v1237 = vld [vmem:[%s5 + $0x9c] sm:$0xf]
    %v1238 = vld [vmem:[%s5 + $0xa0] sm:$0xf]
    %v1239 = vld [vmem:[%s5 + $0xa4] sm:$0xf]
    %v1240 = vld [vmem:[%s5 + $0xa8] sm:$0xf]
    %v1241 = vld [vmem:[%s5 + $0xac] sm:$0xf]
    %v1242 = vld [vmem:[%s5 + $0xb0] sm:$0xf]
    %v1243 = vld [vmem:[%s5 + $0xb4] sm:$0xf]
    %v1244 = vld [vmem:[%s5 + $0xb8] sm:$0xf]
    %v1245 = vld [vmem:[%s5 + $0xbc] sm:$0xf]
    %v1246 = vld [vmem:[%s5 + $0xc0] sm:$0xf]
    %v1247 = vld [vmem:[%s5 + $0xc4] sm:$0xf]
    %v1248 = vld [vmem:[%s5 + $0xc8] sm:$0xf]
    %v1249 = vld [vmem:[%s5 + $0xcc] sm:$0xf]
    %v1250 = vld [vmem:[%s5 + $0xd0] sm:$0xf]
    %v1251 = vld [vmem:[%s5 + $0xd4] sm:$0xf]
    %v1252 = vld [vmem:[%s5 + $0xd8] sm:$0xf]
    %v1253 = vld [vmem:[%s5 + $0xdc] sm:$0xf]
    %v1254 = vld [vmem:[%s5 + $0xe0] sm:$0xf]
    %v1255 = vld [vmem:[%s5 + $0xe4] sm:$0xf]
    %v1256 = vld [vmem:[%s5 + $0xe8] sm:$0xf]
    %v1257 = vld [vmem:[%s5 + $0xec] sm:$0xf]
    %v1258 = vld [vmem:[%s5 + $0xf0] sm:$0xf]
    %v1259 = vld [vmem:[%s5 + $0xf4] sm:$0xf]
    %v1260 = vld [vmem:[%s5 + $0xf8] sm:$0xf]
    %v1261 = vld [vmem:[%s5 + $0xfc] sm:$0xf]
    %v1262 = vld [vmem:[%s6] sm:$0x1]
    %v1264 = vlaneseq
    %v1265 = vshrl.u32 %v1264, 7
    %v1266 = vsub.s32 0, %v1265
    %v1267 = vrot.slane %v1262, %v1266
    %v1333 = vunpack.c.l.b16 %v1198
    %v1334 = vunpack.c.l.b16 %v1199
    %v1335 = vunpack.c.l.b16 %v1200
    %v1336 = vunpack.c.l.b16 %v1201
    %v1337 = vunpack.c.l.b16 %v1202
    %v1338 = vunpack.c.l.b16 %v1203
    %v1339 = vunpack.c.l.b16 %v1204
    %v1340 = vunpack.c.l.b16 %v1205
    %v1341 = vunpack.c.l.b16 %v1206
    %v1342 = vunpack.c.l.b16 %v1207
    %v1343 = vunpack.c.l.b16 %v1208
    %v1344 = vunpack.c.l.b16 %v1209
    %v1345 = vunpack.c.l.b16 %v1210
    %v1346 = vunpack.c.l.b16 %v1211
    %v1347 = vunpack.c.l.b16 %v1212
    %v1348 = vunpack.c.l.b16 %v1213
    %v1349 = vunpack.c.l.b16 %v1214
    %v1350 = vunpack.c.l.b16 %v1215
    %v1351 = vunpack.c.l.b16 %v1216
    %v1352 = vunpack.c.l.b16 %v1217
    %v1353 = vunpack.c.l.b16 %v1218
    %v1354 = vunpack.c.l.b16 %v1219
    %v1355 = vunpack.c.l.b16 %v1220
    %v1356 = vunpack.c.l.b16 %v1221
    %v1357 = vunpack.c.l.b16 %v1222
    %v1358 = vunpack.c.l.b16 %v1223
    %v1359 = vunpack.c.l.b16 %v1224
    %v1360 = vunpack.c.l.b16 %v1225
    %v1361 = vunpack.c.l.b16 %v1226
    %v1362 = vunpack.c.l.b16 %v1227
    %v1363 = vunpack.c.l.b16 %v1228
    %v1364 = vunpack.c.l.b16 %v1229
    %v1365 = vunpack.c.l.b16 %v1230
    %v1366 = vunpack.c.l.b16 %v1231
    %v1367 = vunpack.c.l.b16 %v1232
    %v1368 = vunpack.c.l.b16 %v1233
    %v1369 = vunpack.c.l.b16 %v1234
    %v1370 = vunpack.c.l.b16 %v1235
    %v1371 = vunpack.c.l.b16 %v1236
    %v1372 = vunpack.c.l.b16 %v1237
    %v1373 = vunpack.c.l.b16 %v1238
    %v1374 = vunpack.c.l.b16 %v1239
    %v1375 = vunpack.c.l.b16 %v1240
    %v1376 = vunpack.c.l.b16 %v1241
    %v1377 = vunpack.c.l.b16 %v1242
    %v1378 = vunpack.c.l.b16 %v1243
    %v1379 = vunpack.c.l.b16 %v1244
    %v1380 = vunpack.c.l.b16 %v1245
    %v1381 = vunpack.c.l.b16 %v1246
    %v1382 = vunpack.c.l.b16 %v1247
    %v1383 = vunpack.c.l.b16 %v1248
    %v1384 = vunpack.c.l.b16 %v1249
    %v1385 = vunpack.c.l.b16 %v1250
    %v1386 = vunpack.c.l.b16 %v1251
    %v1387 = vunpack.c.l.b16 %v1252
    %v1388 = vunpack.c.l.b16 %v1253
    %v1389 = vunpack.c.l.b16 %v1254
    %v1390 = vunpack.c.l.b16 %v1255
    %v1391 = vunpack.c.l.b16 %v1256
    %v1392 = vunpack.c.l.b16 %v1257
    %v1393 = vunpack.c.l.b16 %v1258
    %v1394 = vunpack.c.l.b16 %v1259
    %v1395 = vunpack.c.l.b16 %v1260
    %v1396 = vunpack.c.l.b16 %v1261
    %v1397 = vpack.c.b16 %v1334, %v1333
    %v1398 = vpack.c.b16 %v1336, %v1335
    %v1399 = vpack.c.b16 %v1338, %v1337
    %v1400 = vpack.c.b16 %v1340, %v1339
    %v1401 = vpack.c.b16 %v1342, %v1341
    %v1402 = vpack.c.b16 %v1344, %v1343
    %v1403 = vpack.c.b16 %v1346, %v1345
    %v1404 = vpack.c.b16 %v1348, %v1347
    %v1405 = vpack.c.b16 %v1350, %v1349
    %v1406 = vpack.c.b16 %v1352, %v1351
    %v1407 = vpack.c.b16 %v1354, %v1353
    %v1408 = vpack.c.b16 %v1356, %v1355
    %v1409 = vpack.c.b16 %v1358, %v1357
    %v1410 = vpack.c.b16 %v1360, %v1359
    %v1411 = vpack.c.b16 %v1362, %v1361
    %v1412 = vpack.c.b16 %v1364, %v1363
    %v1413 = vpack.c.b16 %v1366, %v1365
    %v1414 = vpack.c.b16 %v1368, %v1367
    %v1415 = vpack.c.b16 %v1370, %v1369
    %v1416 = vpack.c.b16 %v1372, %v1371
    %v1417 = vpack.c.b16 %v1374, %v1373
    %v1418 = vpack.c.b16 %v1376, %v1375
    %v1419 = vpack.c.b16 %v1378, %v1377
    %v1420 = vpack.c.b16 %v1380, %v1379
    %v1421 = vpack.c.b16 %v1382, %v1381
    %v1422 = vpack.c.b16 %v1384, %v1383
    %v1423 = vpack.c.b16 %v1386, %v1385
    %v1424 = vpack.c.b16 %v1388, %v1387
    %v1425 = vpack.c.b16 %v1390, %v1389
    %v1426 = vpack.c.b16 %v1392, %v1391
    %v1427 = vpack.c.b16 %v1394, %v1393
    %v1428 = vpack.c.b16 %v1396, %v1395
    %1461 = vmatprep.subr.bf16.mxu0 0
    %1462 = vmatpush1.bf16.msra.mxu0 %v1397
    %1463 = vmatprep.subr.bf16.mxu0 0
    %1464 = vmatpush1.bf16.msra.mxu0 %v1398
    %1465 = vmatprep.subr.bf16.mxu0 0
    %1466 = vmatpush1.bf16.msra.mxu0 %v1399
    %1467 = vmatprep.subr.bf16.mxu0 0
    %1468 = vmatpush1.bf16.msra.mxu0 %v1400
    %1469 = vmatprep.subr.bf16.mxu0 0
    %1470 = vmatpush1.bf16.msra.mxu0 %v1401
    %1471 = vmatprep.subr.bf16.mxu0 0
    %1472 = vmatpush1.bf16.msra.mxu0 %v1402
    %1473 = vmatprep.subr.bf16.mxu0 0
    %1474 = vmatpush1.bf16.msra.mxu0 %v1403
    %1475 = vmatprep.subr.bf16.mxu0 0
    %1476 = vmatpush1.bf16.msra.mxu0 %v1404
    %1477 = vmatprep.subr.bf16.mxu0 0
    %1478 = vmatpush1.bf16.msra.mxu0 %v1405
    %1479 = vmatprep.subr.bf16.mxu0 0
    %1480 = vmatpush1.bf16.msra.mxu0 %v1406
    %1481 = vmatprep.subr.bf16.mxu0 0
    %1482 = vmatpush1.bf16.msra.mxu0 %v1407
    %1483 = vmatprep.subr.bf16.mxu0 0
    %1484 = vmatpush1.bf16.msra.mxu0 %v1408
    %1485 = vmatprep.subr.bf16.mxu0 0
    %1486 = vmatpush1.bf16.msra.mxu0 %v1409
    %1487 = vmatprep.subr.bf16.mxu0 0
    %1488 = vmatpush1.bf16.msra.mxu0 %v1410
    %1489 = vmatprep.subr.bf16.mxu0 0
    %1490 = vmatpush1.bf16.msra.mxu0 %v1411
    %1491 = vmatprep.subr.bf16.mxu0 0
    %1492 = vmatpush1.bf16.msra.mxu0 %v1412
    %1493 = vmatprep.mubr.bf16.mxu0 %v1195
    %1494 = vmatmul.mubr.bf16.gmra.mrb[0].mxu0 %v1194
    %v1495 = vpop.f32.mrb[0].mxu0
    %v1496 = vadd.f32 %v1267, %v1495
    %v1497 = vpop.f32.mrb[0].mxu0
    %v1498 = vpop.f32.mrb[0].mxu0
    %v1499 = vpop.f32.mrb[0].mxu0
    %1500 = vdwg.mxu0
    %1501 = vmatprep.subr.bf16.mxu0 0
    %1502 = vmatpush1.bf16.msra.mxu0 %v1413
    %1503 = vmatprep.subr.bf16.mxu0 0
    %1504 = vmatpush1.bf16.msra.mxu0 %v1414
    %1505 = vmatprep.subr.bf16.mxu0 0
    %1506 = vmatpush1.bf16.msra.mxu0 %v1415
    %1507 = vmatprep.subr.bf16.mxu0 0
    %1508 = vmatpush1.bf16.msra.mxu0 %v1416
    %1509 = vmatprep.subr.bf16.mxu0 0
    %1510 = vmatpush1.bf16.msra.mxu0 %v1417
    %1511 = vmatprep.subr.bf16.mxu0 0
    %1512 = vmatpush1.bf16.msra.mxu0 %v1418
    %1513 = vmatprep.subr.bf16.mxu0 0
    %1514 = vmatpush1.bf16.msra.mxu0 %v1419
    %1515 = vmatprep.subr.bf16.mxu0 0
    %1516 = vmatpush1.bf16.msra.mxu0 %v1420
    %1517 = vmatprep.subr.bf16.mxu0 0
    %1518 = vmatpush1.bf16.msra.mxu0 %v1421
    %1519 = vmatprep.subr.bf16.mxu0 0
    %1520 = vmatpush1.bf16.msra.mxu0 %v1422
    %1521 = vmatprep.subr.bf16.mxu0 0
    %1522 = vmatpush1.bf16.msra.mxu0 %v1423
    %1523 = vmatprep.subr.bf16.mxu0 0
    %1524 = vmatpush1.bf16.msra.mxu0 %v1424
    %1525 = vmatprep.subr.bf16.mxu0 0
    %1526 = vmatpush1.bf16.msra.mxu0 %v1425
    %1527 = vmatprep.subr.bf16.mxu0 0
    %1528 = vmatpush1.bf16.msra.mxu0 %v1426
    %1529 = vmatprep.subr.bf16.mxu0 0
    %1530 = vmatpush1.bf16.msra.mxu0 %v1427
    %1531 = vmatprep.subr.bf16.mxu0 0
    %1532 = vmatpush1.bf16.msra.mxu0 %v1428
    %1533 = vmatprep.mubr.bf16.mxu0 %v1197
    %1534 = vmatmul.mubr.bf16.gmra.mrb[0].mxu0 %v1196
    %v1535 = vpop.f32.mrb[0].mxu0
    %v1536 = vadd.f32 %v1496, %v1535
    %v1537 = vpop.f32.mrb[0].mxu0
    %v1538 = vpop.f32.mrb[0].mxu0
    %v1539 = vpop.f32.mrb[0].mxu0
    %1540 = vdwg.mxu0
    %vm1541 = vcmask 64512
    %1542 = vst.msk [vmem:[#allocation5] sm:$0xff] %vm1541, %v1536
    // Predicated region
    $region34: #{tpu_custom_call.1} parent=1 // pred_check
      _
    $region35: #{tpu_custom_call.1} parent=1 // pred_check_branch
      %1544 = sbr.rel (0) target = $region37
    $region36: #{tpu_custom_call.1} parent=1 // pred_region
      %s1546 = ssub.s32 128, 128
      %1547 = vsyncadd [#allocation4], %s1546
      %s1549 = sshll.u32 [#allocation5], 4
      %s1550 = int_to_ptr.vmem [resolvable:$true] %s1549
      %1552 = dma.vmem_to_hbm [thread:$0]  %s1550, 128, %s7, [#allocation4]
    $region37: #{tpu_custom_call.1} parent=1 // pred_fallthru
      _
    // Predicated region
    $region38: #{tpu_custom_call.1} parent=1 // pred_check
      _
    $region39: #{tpu_custom_call.1} parent=1 // pred_check_branch
      %1554 = sbr.rel (0) target = $region41
    $region40: #{tpu_custom_call.1} parent=1 // pred_region
      %1555 = dma.done [#allocation4], 128
    $region41: #{tpu_custom_call.1} parent=1 // pred_fallthru
      _
    %1556 = vsyncpa [#allocation3], 1
    %1557 = vsyncpa [#allocation4], 1

</llo_original>
